<compile_context>
chip_gen: v6e
topology: v6e:2x2x1
jax: 0.10.0
libtpu: 0.0.40
codegen_flags: <defaults>
</compile_context>

<pallas_src>
import functools

import jax
import jax.numpy as jnp
from jax.experimental import pallas as pl
from jax.experimental.pallas import tpu as pltpu


def _round_up(v, m):
    return ((v + m - 1) // m) * m


# ---------------------------------------------------------------------------
# Kernels
# ---------------------------------------------------------------------------

def _gated_dense_kernel(x_ref, w_ref, b_ref, o_ref, *, half):
    """K fully resident: one fused dot over the concatenated [Wh | Wg] tile,
    bias add + sigmoid gating in the epilogue. No scratch, no K grid axis."""
    acc = jnp.dot(x_ref[...], w_ref[0], preferred_element_type=jnp.float32)
    acc = acc + b_ref[0]                      # (tm, 2*half) + (1, 2*half)
    h = acc[:, :half]
    g = jax.nn.sigmoid(acc[:, half:])
    o_ref[...] = (h * g).astype(o_ref.dtype)


def _gated_dense_kernel_kblocked(x_ref, w_ref, b_ref, o_ref, acc_ref, *, half):
    """K-blocked fallback: (tm, 2*tn) f32 accumulator resident across k."""
    k = pl.program_id(2)

    @pl.when(k == 0)
    def _():
        acc_ref[...] = jnp.zeros_like(acc_ref)

    acc_ref[...] += jnp.dot(x_ref[...], w_ref[0],
                            preferred_element_type=jnp.float32)

    @pl.when(k == pl.num_programs(2) - 1)
    def _():
        acc = acc_ref[...] + b_ref[0]
        h = acc[:, :half]
        g = jax.nn.sigmoid(acc[:, half:])
        o_ref[...] = (h * g).astype(o_ref.dtype)


# ---------------------------------------------------------------------------
# Tiling
# ---------------------------------------------------------------------------

# Conservative budget: fits the 16 MiB default scoped VMEM on v5e, leaves
# plenty of headroom on v6e (128 MiB) and v7x (64 MiB per TensorCore).
_VMEM_BUDGET = 12 * 1024 * 1024


def _choose_tiles(M, N_pad, K, in_itemsize, out_itemsize):
    tm = 256 if M >= 256 else _round_up(M, 8)
    if N_pad <= 512:
        tn = N_pad
    else:
        tn = max(t for t in (512, 256, 128) if N_pad % t == 0)

    def vmem_bytes(tk):
        x_t = tm * tk * in_itemsize
        w_t = tk * 2 * tn * in_itemsize
        b_t = 2 * tn * 4
        o_t = tm * tn * out_itemsize
        acc = tm * 2 * tn * 4
        # double-buffered input/output streams + accumulator
        return 2 * (x_t + w_t + b_t + o_t) + acc

    if vmem_bytes(K) <= _VMEM_BUDGET:
        return tm, tn, K, True            # keep the whole K resident
    for tk in (2048, 1024, 512, 256, 128):
        if vmem_bytes(tk) <= _VMEM_BUDGET:
            return tm, tn, tk, False
    return tm, tn, 128, False


# ---------------------------------------------------------------------------
# Wrapper
# ---------------------------------------------------------------------------

def gated_dense(x, wh, bh, wg, bg, *, compute_dtype=None):
    """Fused GatedDense forward: (x @ wh + bh) * sigmoid(x @ wg + bg).

    x: (M, K); wh, wg: (K, N) (transpose of nn.Linear's (out, in)); bh/bg: (N,).
    compute_dtype: optionally cast x / weights (e.g. jnp.bfloat16); the
    accumulation and epilogue (bias, sigmoid, gating) stay in float32.
    """
    M, K = x.shape
    Kw, N = wh.shape
    assert Kw == K and wg.shape == (K, N) and bh.shape == (N,) and bg.shape == (N,)

    in_dtype = jnp.dtype(compute_dtype) if compute_dtype is not None else x.dtype
    out_dtype = x.dtype

    N_pad = _round_up(N, 128)
    tm, tn, tk, k_resident = _choose_tiles(
        M, N_pad, K, jnp.dtype(in_dtype).itemsize, jnp.dtype(out_dtype).itemsize)
    M_pad = _round_up(M, tm)
    K_pad = K if k_resident else _round_up(K, tk)
    n_tiles = N_pad // tn
    k_tiles = 1 if k_resident else K_pad // tk

    # Zero padding is exactly neutral for the matmul; padded rows/cols are
    # sliced off at the end.
    x_p = jnp.pad(x, ((0, M_pad - M), (0, K_pad - K)))
    wh_p = jnp.pad(wh, ((0, K_pad - K), (0, N_pad - N)))
    wg_p = jnp.pad(wg, ((0, K_pad - K), (0, N_pad - N)))
    bh_p = jnp.pad(bh, (0, N_pad - N))
    bg_p = jnp.pad(bg, (0, N_pad - N))

    # Per-N-tile concatenated weight [Wh_j | Wg_j]: a single MXU stream.
    def tileify(w):  # (K_pad, N_pad) -> (n_tiles, K_pad, tn)
        return w.reshape(K_pad, n_tiles, tn).transpose(1, 0, 2)

    w_r = jnp.concatenate([tileify(wh_p), tileify(wg_p)], axis=-1)   # (n_tiles, K_pad, 2*tn)
    b_r = jnp.concatenate([bh_p.reshape(n_tiles, 1, tn),
                           bg_p.reshape(n_tiles, 1, tn)], axis=-1)   # (n_tiles, 1, 2*tn)

    x_p = x_p.astype(in_dtype)
    w_r = w_r.astype(in_dtype)
    b_r = b_r.astype(jnp.float32)

    if k_resident:
        grid = (M_pad // tm, n_tiles)
        in_specs = [
            pl.BlockSpec((tm, K_pad), lambda i, j: (i, 0)),            # x
            pl.BlockSpec((1, K_pad, 2 * tn), lambda i, j: (j, 0, 0)),  # [Wh|Wg]
            pl.BlockSpec((1, 1, 2 * tn), lambda i, j: (j, 0, 0)),      # [bh|bg]
        ]
        out_specs = pl.BlockSpec((tm, tn), lambda i, j: (i, j))
        scratch = []
        semantics = ("parallel", "parallel")
        kernel = functools.partial(_gated_dense_kernel, half=tn)
    else:
        grid = (M_pad // tm, n_tiles, k_tiles)
        in_specs = [
            pl.BlockSpec((tm, tk), lambda i, j, k: (i, k)),
            pl.BlockSpec((1, tk, 2 * tn), lambda i, j, k: (j, k, 0)),
            pl.BlockSpec((1, 1, 2 * tn), lambda i, j, k: (j, 0, 0)),
        ]
        out_specs = pl.BlockSpec((tm, tn), lambda i, j, k: (i, j))
        scratch = [pltpu.VMEM((tm, 2 * tn), jnp.float32)]
        semantics = ("parallel", "parallel", "arbitrary")
        kernel = functools.partial(_gated_dense_kernel_kblocked, half=tn)

    out = pl.pallas_call(
        kernel,
        out_shape=jax.ShapeDtypeStruct((M_pad, N_pad), out_dtype),
        grid_spec=pltpu.PrefetchScalarGridSpec(
            num_scalar_prefetch=0,
            grid=grid,
            in_specs=in_specs,
            out_specs=out_specs,
            scratch_shapes=scratch,
        ),
        compiler_params=pltpu.CompilerParams(dimension_semantics=semantics),
    )(x_p, w_r, b_r)

    return out[:M, :N]


def gated_dense_ref(x, wh, bh, wg, bg):
    h = x @ wh + bh
    g = jax.nn.sigmoid(x @ wg + bg)
    return h * g


if __name__ == "__main__":
    key = jax.random.PRNGKey(0)
    k_x, k_wh, k_bh, k_wg, k_bg = jax.random.split(key, 5)

    # --- case 1: the module's natural small shape -------------------------
    batch, input_size, output_size = 16, 64, 128
    x = jax.random.normal(k_x, (batch, input_size), dtype=jnp.float32)
    # PyTorch nn.Linear weights are (out, in); we store the transpose (in, out).
    wh = jax.random.normal(k_wh, (input_size, output_size), dtype=jnp.float32) * 0.1
    bh = jax.random.normal(k_bh, (output_size,), dtype=jnp.float32) * 0.1
    wg = jax.random.normal(k_wg, (input_size, output_size), dtype=jnp.float32) * 0.1
    bg = jax.random.normal(k_bg, (output_size,), dtype=jnp.float32) * 0.1

    out = jax.block_until_ready(gated_dense(x, wh, bh, wg, bg))
    ref = gated_dense_ref(x, wh, bh, wg, bg)
    assert out.shape == (batch, output_size)
    assert jnp.allclose(out, ref, atol=1e-5, rtol=1e-5), "mismatch vs reference (case 1)"

    # --- case 2: ragged shape exercising the padding path ------------------
    M2, K2, N2 = 10, 50, 96
    x2 = jax.random.normal(k_x, (M2, K2), dtype=jnp.float32)
    wh2 = jax.random.normal(k_wh, (K2, N2), dtype=jnp.float32) * 0.1
    bh2 = jax.random.normal(k_bh, (N2,), dtype=jnp.float32) * 0.1
    wg2 = jax.random.normal(k_wg, (K2, N2), dtype=jnp.float32) * 0.1
    bg2 = jax.random.normal(k_bg, (N2,), dtype=jnp.float32) * 0.1

    out2 = jax.block_until_ready(gated_dense(x2, wh2, bh2, wg2, bg2))
    ref2 = gated_dense_ref(x2, wh2, bh2, wg2, bg2)
    assert out2.shape == (M2, N2)
    assert jnp.allclose(out2, ref2, atol=1e-5, rtol=1e-5), "mismatch vs reference (case 2)"

    print("KERNEL_OK")
</pallas_src>

<mosaic_0001>
module attributes {stable_mosaic.version = 11 : i64} {
  func.func @_gated_dense_kernel(%arg0: i32, %arg1: i32, %arg2: memref<16x64xf32, #tpu.memory_space<vmem>>, %arg3: memref<1x64x256xf32, #tpu.memory_space<vmem>>, %arg4: memref<1x1x256xf32, #tpu.memory_space<vmem>>, %arg5: memref<16x128xf32, #tpu.memory_space<vmem>>) attributes {dimension_semantics = [#tpu.dimension_semantics<parallel>, #tpu.dimension_semantics<parallel>], iteration_bounds = array<i64: 1, 1>, scalar_prefetch = 0 : i64, scratch_operands = 0 : i64, tpu.core_type = #tpu.core_type<tc>, window_params = [{transform_indices = @transform_0, window_bounds = array<i64: 16, 64>}, {transform_indices = @transform_1, window_bounds = array<i64: 1, 64, 256>}, {transform_indices = @transform_2, window_bounds = array<i64: 1, 1, 256>}, {transform_indices = @transform_3, window_bounds = array<i64: 16, 128>}]} {
    %c0 = arith.constant 0 : index
    %c0_0 = arith.constant 0 : index
    %0 = vector.load %arg2[%c0, %c0_0] : memref<16x64xf32, #tpu.memory_space<vmem>>, vector<16x64xf32>
    %c0_1 = arith.constant 0 : index
    %c0_2 = arith.constant 0 : index
    %c0_3 = arith.constant 0 : index
    %1 = vector.load %arg3[%c0_1, %c0_2, %c0_3] : memref<1x64x256xf32, #tpu.memory_space<vmem>>, vector<1x64x256xf32>
    %2 = vector.shape_cast %1 : vector<1x64x256xf32> to vector<64x256xf32>
    %cst = arith.constant dense<0.000000e+00> : vector<16x256xf32>
    %3 = tpu.matmul %0, %2, %cst {dimension_numbers = #tpu.dot_dimension_numbers<[1], [0], [0], [1], [0, 0, 1, 1], [], []>} : vector<16x64xf32>, vector<64x256xf32>, vector<16x256xf32> -> vector<16x256xf32>
    %c0_4 = arith.constant 0 : index
    %c0_5 = arith.constant 0 : index
    %c0_6 = arith.constant 0 : index
    %4 = vector.load %arg4[%c0_4, %c0_5, %c0_6] : memref<1x1x256xf32, #tpu.memory_space<vmem>>, vector<1x1x256xf32>
    %5 = vector.shape_cast %4 : vector<1x1x256xf32> to vector<1x256xf32>
    %6 = vector.broadcast %5 : vector<1x256xf32> to vector<16x256xf32>
    %7 = arith.addf %3, %6 : vector<16x256xf32>
    %8 = vector.extract_strided_slice %7 {offsets = [0, 0], sizes = [16, 128], strides = [1, 1]} : vector<16x256xf32> to vector<16x128xf32>
    %9 = vector.extract_strided_slice %7 {offsets = [0, 128], sizes = [16, 128], strides = [1, 1]} : vector<16x256xf32> to vector<16x128xf32>
    %10 = arith.negf %9 : vector<16x128xf32>
    %11 = math.exp %10 : vector<16x128xf32>
    %cst_7 = arith.constant 1.000000e+00 : f32
    %12 = vector.broadcast %cst_7 : f32 to vector<16x128xf32>
    %13 = arith.addf %12, %11 : vector<16x128xf32>
    %14 = arith.divf %12, %13 : vector<16x128xf32>
    %15 = arith.mulf %8, %14 : vector<16x128xf32>
    %c0_8 = arith.constant 0 : index
    %c0_9 = arith.constant 0 : index
    %16 = vector.load %arg5[%c0_8, %c0_9] : memref<16x128xf32, #tpu.memory_space<vmem>>, vector<16x128xf32>
    tpu.vector_store %arg5[%c0_8, %c0_9], %15 {strides = array<i32>} : memref<16x128xf32, #tpu.memory_space<vmem>>, vector<16x128xf32>,
    return
  }
  func.func @transform_0(%arg0: i32, %arg1: i32) -> (i32, i32) {
    %c0_i32 = arith.constant 0 : i32
    %c0_i32_0 = arith.constant 0 : i32
    return %arg0, %c0_i32 : i32, i32
  }
  func.func @transform_1(%arg0: i32, %arg1: i32) -> (i32, i32, i32) {
    %c0_i32 = arith.constant 0 : i32
    %c0_i32_0 = arith.constant 0 : i32
    %c0_i32_1 = arith.constant 0 : i32
    return %arg1, %c0_i32, %c0_i32_0 : i32, i32, i32
  }
  func.func @transform_2(%arg0: i32, %arg1: i32) -> (i32, i32, i32) {
    %c0_i32 = arith.constant 0 : i32
    %c0_i32_0 = arith.constant 0 : i32
    %c0_i32_1 = arith.constant 0 : i32
    return %arg1, %c0_i32, %c0_i32_0 : i32, i32, i32
  }
  func.func @transform_3(%arg0: i32, %arg1: i32) -> (i32, i32) {
    %c0_i32 = arith.constant 0 : i32
    return %arg0, %arg1 : i32, i32
  }
}

</mosaic_0001>

<llo_original>
// kernel: tpu_custom_call.1
$region0: #{tpu_custom_call.1}
  #allocation0 [shape = 'u32[]', space=smem, size = 0x4, offset = 0x4, fixed_abs, tag = 'smem constant byte address 0x4 - core index']
  #allocation1 [shape = 'u32[144,128]{1,0:T(1,128)}', space=vmem, size = 0x12000, scoped, tag = 'internal scratch']
  %s0 = inlined_call_operand.hbm [shape: f32[16,64], index: 0, kind: input, shape index: {}]
  %s1 = inlined_call_operand.hbm [shape: f32[1,64,256], index: 1, kind: input, shape index: {}]
  %s2 = inlined_call_operand.vmem [shape: f32[1,1,256], index: 2, kind: input, shape index: {}]
  %s3 = inlined_call_operand.hbm [shape: f32[16,128], index: 3, kind: output, shape index: {}]
  %s4 = sld [smem:[#allocation0]]
  $region30: #{tpu_custom_call.1} parent=0
    _
  %s6 = ssub.s32 1, %s4
  %s7 = scalar_select 0, %s6, %s4
  $region1: #{tpu_custom_call.1} parent=0
    #allocation2 [shape = 'u8[8192]{0}', space=vmem, size = 0x2000, scoped, tag = 'input window, operand 0, single buffered']
    #allocation3 [shape = 's32[1]{0}', space=sflag, size = 0x4, scoped, tag = 'scoped memory for tpu_custom_call.1']
    #allocation4 [shape = 's32[1]{0}', space=sflag, size = 0x4, scoped, tag = 'scoped memory for tpu_custom_call.1']
    #allocation5 [shape = 'u8[65536]{0}', space=vmem, size = 0x10000, scoped, tag = 'input window, operand 1, single buffered']
    #allocation6 [shape = 's32[1]{0}', space=sflag, size = 0x4, scoped, tag = 'scoped memory for tpu_custom_call.1']
    #allocation7 [shape = 'u8[8192]{0}', space=vmem, size = 0x2000, scoped, tag = 'output window, operand 0, single buffered']
    %8 = vsyncpa [#allocation3], 0
    %9 = vsyncpa [#allocation6], 0
    %10 = vsyncpa [#allocation4], 0
    // Predicated region
    $region2: #{tpu_custom_call.1} parent=1 // pred_check
      _
    $region3: #{tpu_custom_call.1} parent=1 // pred_check_branch
      %12 = sbr.rel (0) target = $region5
    $region4: #{tpu_custom_call.1} parent=1 // pred_region
      %s14 = ssub.s32 256, 256
      %15 = vsyncadd [#allocation3], %s14
      %s16 = sshll.u32 [#allocation2], 4
      %s17 = int_to_ptr.vmem [resolvable:$true] %s16
      %22 = dma.hbm_to_vmem [thread:$0]  %s0, 256, %s17, [#allocation3], 128, 128, 8
    $region5: #{tpu_custom_call.1} parent=1 // pred_fallthru
      _
    // Predicated region
    $region6: #{tpu_custom_call.1} parent=1 // pred_check
      _
    $region7: #{tpu_custom_call.1} parent=1 // pred_check_branch
      %24 = sbr.rel (0) target = $region9
    $region8: #{tpu_custom_call.1} parent=1 // pred_region
      %s26 = ssub.s32 2048, 2048
      %27 = vsyncadd [#allocation6], %s26
      %s28 = sshll.u32 [#allocation5], 4
      %s29 = int_to_ptr.vmem [resolvable:$true] %s28
      %34 = dma.hbm_to_vmem [thread:$0]  %s1, 2048, %s29, [#allocation6], 256, 256, 16
    $region9: #{tpu_custom_call.1} parent=1 // pred_fallthru
      _
    // Predicated region
    $region10: #{tpu_custom_call.1} parent=1 // pred_check
      _
    $region11: #{tpu_custom_call.1} parent=1 // pred_check_branch
      %36 = sbr.rel (0) target = $region13
    $region12: #{tpu_custom_call.1} parent=1 // pred_region
      _
    $region13: #{tpu_custom_call.1} parent=1 // pred_fallthru
      _
    // Predicated region
    $region14: #{tpu_custom_call.1} parent=1 // pred_check
      _
    $region15: #{tpu_custom_call.1} parent=1 // pred_check_branch
      %38 = sbr.rel (0) target = $region17
    $region16: #{tpu_custom_call.1} parent=1 // pred_region
      %39 = dma.done [#allocation3], 256
    $region17: #{tpu_custom_call.1} parent=1 // pred_fallthru
      _
    // Predicated region
    $region18: #{tpu_custom_call.1} parent=1 // pred_check
      _
    $region19: #{tpu_custom_call.1} parent=1 // pred_check_branch
      %41 = sbr.rel (0) target = $region21
    $region20: #{tpu_custom_call.1} parent=1 // pred_region
      %42 = dma.done [#allocation6], 2048
    $region21: #{tpu_custom_call.1} parent=1 // pred_fallthru
      _
    %v43 = vld [vmem:[#allocation2] sm:$0xff]
    %v44 = vld [vmem:[#allocation2 + $0x8] sm:$0xff]
    %v45 = vld [vmem:[#allocation5] sm:$0xff]
    %v46 = vld [vmem:[#allocation5 + $0x8] sm:$0xff]
    %v47 = vld [vmem:[#allocation5 + $0x10] sm:$0xff]
    %v48 = vld [vmem:[#allocation5 + $0x18] sm:$0xff]
    %v49 = vld [vmem:[#allocation5 + $0x20] sm:$0xff]
    %v50 = vld [vmem:[#allocation5 + $0x28] sm:$0xff]
    %v51 = vld [vmem:[#allocation5 + $0x30] sm:$0xff]
    %v52 = vld [vmem:[#allocation5 + $0x38] sm:$0xff]
    %v53 = vld [vmem:[#allocation5 + $0x40] sm:$0xff]
    %v54 = vld [vmem:[#allocation5 + $0x48] sm:$0xff]
    %v55 = vld [vmem:[#allocation5 + $0x50] sm:$0xff]
    %v56 = vld [vmem:[#allocation5 + $0x58] sm:$0xff]
    %v57 = vld [vmem:[#allocation5 + $0x60] sm:$0xff]
    %v58 = vld [vmem:[#allocation5 + $0x68] sm:$0xff]
    %v59 = vld [vmem:[#allocation5 + $0x70] sm:$0xff]
    %v60 = vld [vmem:[#allocation5 + $0x78] sm:$0xff]
    %v61 = vld [vmem:[%s2] sm:$0x3]
    %v63 = vlaneseq
    %v64 = vshrl.u32 %v63, 7
    %v65 = vsub.s32 0, %v64
    %v66 = vrot.slane %v61, %v65
    %v67 = vlaneseq
    %v68 = vshrl.u32 %v67, 7
    %v69 = vsub.s32 1, %v68
    %v70 = vrot.slane %v61, %v69
    %vm73 = vcmask 523264
    %v75 = vsel %vm73, %v43, 0
    %v78 = vsel %vm73, %v44, 0
    %80 = vmatprep.subr.mxu0 0.0
    %81 = vmatpush1.msra.mxu0 0.0
    %82 = vmatprep.subr.mxu0 0.0
    %83 = vmatpush1.msra.mxu0 0.0
    %84 = vmatprep.subr.mxu0 0.0
    %85 = vmatpush1.msra.mxu0 0.0
    %86 = vmatprep.subr.mxu0 0.0
    %87 = vmatpush1.msra.mxu0 0.0
    %88 = vmatprep.subr.mxu0 0.0
    %89 = vmatpush1.msra.mxu0 0.0
    %90 = vmatprep.subr.mxu0 0.0
    %91 = vmatpush1.msra.mxu0 0.0
    %92 = vmatprep.subr.mxu0 0.0
    %93 = vmatpush1.msra.mxu0 0.0
    %94 = vmatprep.subr.mxu0 0.0
    %95 = vmatpush1.msra.mxu0 0.0
    %96 = vmatprep.subr.mxu0 %v60
    %97 = vmatpush1.msra.mxu0 %v59
    %98 = vmatprep.subr.mxu0 %v58
    %99 = vmatpush1.msra.mxu0 %v57
    %100 = vmatprep.subr.mxu0 %v56
    %101 = vmatpush1.msra.mxu0 %v55
    %102 = vmatprep.subr.mxu0 %v54
    %103 = vmatpush1.msra.mxu0 %v53
    %104 = vmatprep.subr.mxu0 %v52
    %105 = vmatpush1.msra.mxu0 %v51
    %106 = vmatprep.subr.mxu0 %v50
    %107 = vmatpush1.msra.mxu0 %v49
    %108 = vmatprep.subr.mxu0 %v48
    %109 = vmatpush1.msra.mxu0 %v47
    %110 = vmatprep.subr.mxu0 %v46
    %111 = vmatpush1.msra.mxu0 %v45
    %112 = vmatprep.subr.mxu0 0.0
    %113 = vmatpush2.msra.mxu0 0.0
    %114 = vmatprep.subr.mxu0 0.0
    %115 = vmatpush2.msra.mxu0 0.0
    %116 = vmatprep.subr.mxu0 0.0
    %117 = vmatpush2.msra.mxu0 0.0
    %118 = vmatprep.subr.mxu0 0.0
    %119 = vmatpush2.msra.mxu0 0.0
    %120 = vmatprep.subr.mxu0 0.0
    %121 = vmatpush2.msra.mxu0 0.0
    %122 = vmatprep.subr.mxu0 0.0
    %123 = vmatpush2.msra.mxu0 0.0
    %124 = vmatprep.subr.mxu0 0.0
    %125 = vmatpush2.msra.mxu0 0.0
    %126 = vmatprep.subr.mxu0 0.0
    %127 = vmatpush2.msra.mxu0 0.0
    %128 = vmatprep.subr.mxu0 0.0
    %129 = vmatpush2.msra.mxu0 0.0
    %130 = vmatprep.subr.mxu0 0.0
    %131 = vmatpush2.msra.mxu0 0.0
    %132 = vmatprep.subr.mxu0 0.0
    %133 = vmatpush2.msra.mxu0 0.0
    %134 = vmatprep.subr.mxu0 0.0
    %135 = vmatpush2.msra.mxu0 0.0
    %136 = vmatprep.subr.mxu0 0.0
    %137 = vmatpush2.msra.mxu0 0.0
    %138 = vmatprep.subr.mxu0 0.0
    %139 = vmatpush2.msra.mxu0 0.0
    %140 = vmatprep.subr.mxu0 0.0
    %141 = vmatpush2.msra.mxu0 0.0
    %142 = vmatprep.subr.mxu0 0.0
    %143 = vmatpush2.msra.mxu0 0.0
    %144 = vmatprep.mubr.f32.mxu0 0.0
    %145 = vmatmul.mubr.f32.gmra.mxu0 %v75
    %v146 = vpop.f32.mrf.mxu0
    %v147 = vadd.f32 %v66, %v146
    %v148 = vpop.f32.mrf.mxu0
    %v149 = vadd.f32 %v70, %v148
    %150 = vmatprep.mubr.f32.mxu0 0.0
    %151 = vmatmul.mubr.f32.gmra.mxu0 %v78
    %v152 = vpop.f32.mrf.mxu0
    %v153 = vadd.f32 %v66, %v152
    %v154 = vpop.f32.mrf.mxu0
    %v155 = vadd.f32 %v70, %v154
    %156 = vdwg.mxu0
    %v157 = vxor.u32 %v149, 2147483648
    %v158 = vxor.u32 %v155, 2147483648
    %v159 = vmul.f32 %v157, 1.442695
    %v160 = vpow.pop %v159
    %v161 = vmul.f32 %v158, 1.442695
    %v162 = vpow.pop %v161
    %v163 = vadd.f32 %v160, 1.0
    %v164 = vadd.f32 %v162, 1.0
    %v165 = vrcp.pop %v163
    %v166 = vmul.f32 1.0, %v165
    %v167 = vrcp.pop %v164
    %v168 = vmul.f32 1.0, %v167
    %v169 = vmul.f32 %v147, %v166
    %v170 = vmul.f32 %v153, %v168
    %171 = vst [vmem:[#allocation7] sm:$0xff] %v169
    %172 = vst [vmem:[#allocation7 + $0x8] sm:$0xff] %v170
    // Predicated region
    $region22: #{tpu_custom_call.1} parent=1 // pred_check
      _
    $region23: #{tpu_custom_call.1} parent=1 // pred_check_branch
      %174 = sbr.rel (0) target = $region25
    $region24: #{tpu_custom_call.1} parent=1 // pred_region
      %s176 = ssub.s32 256, 256
      %177 = vsyncadd [#allocation4], %s176
      %s178 = sshll.u32 [#allocation7], 4
      %s179 = int_to_ptr.vmem [resolvable:$true] %s178
      %184 = dma.vmem_to_hbm [thread:$0]  %s179, 256, %s3, [#allocation4], 128, 128, 8
    $region25: #{tpu_custom_call.1} parent=1 // pred_fallthru
      _
    // Predicated region
    $region26: #{tpu_custom_call.1} parent=1 // pred_check
      _
    $region27: #{tpu_custom_call.1} parent=1 // pred_check_branch
      %186 = sbr.rel (0) target = $region29
    $region28: #{tpu_custom_call.1} parent=1 // pred_region
      %187 = dma.done [#allocation4], 256
    $region29: #{tpu_custom_call.1} parent=1 // pred_fallthru
      _
    %188 = vsyncpa [#allocation3], 1
    %189 = vsyncpa [#allocation6], 1
    %190 = vsyncpa [#allocation4], 1

</llo_original>
